<compile_context>
chip_gen: v6e
topology: v6e:2x2x1
jax: 0.10.0
libtpu: 0.0.40
codegen_flags: <defaults>
</compile_context>

<pallas_src>
import math
import jax
import jax.numpy as jnp
from jax.experimental import pallas as pl
from jax.experimental.pallas import tpu as pltpu


def _round_up(x, m):
    return (x + m - 1) // m * m


def _cross_attention_kernel(text_ref, inp_ref, wt_ref, wi_ref, b_ref, out_ref):
    # text_ref: (TB, Ft), inp_ref: (TB, T, Fi)
    # wt_ref: (1, Ft) f32, wi_ref: (1, Fi) f32, b_ref: (1, 1) f32
    text = text_ref[...]
    inp = inp_ref[...]
    wt = wt_ref[...]                       # (1, Ft)
    wi = wi_ref[...].reshape(1, 1, -1)     # (1, 1, Fi)
    b = b_ref[0, 0]                        # scalar

    # fc(cat([text_expand, input])) via split-weight decomposition:
    #   score[n, t] = text[n,:]·w_text + input[n,t,:]·w_input + b
    s_text = jnp.sum(text.astype(jnp.float32) * wt, axis=1, keepdims=True)   # (TB, 1)
    s_in = jnp.sum(inp.astype(jnp.float32) * wi, axis=2)                     # (TB, T)
    score = s_text + s_in + b                                                # (TB, T)
    gate = 1.0 / (1.0 + jnp.exp(-score))                                     # sigmoid

    # (w * input).sum(dim=1)  ==  per-example (1,T)@(T,Fi)  -> batched MXU matmul.
    r = jnp.einsum(
        "nqt,ntf->nqf",
        gate[:, None, :].astype(inp.dtype), inp,
        preferred_element_type=jnp.float32,
    )                                                                        # (TB, 1, Fi)
    out_ref[...] = r[:, 0, :].astype(out_ref.dtype)


def cross_attention(text, inp, fc_w, fc_b, *, block_n=128):
    """text: (N, Ft); inp: (N, T, Fi); fc_w: (1, Ft+Fi) [PyTorch layout]; fc_b: (1,)."""
    N, T, Fi = inp.shape
    Ft = text.shape[-1]

    # Split the tiny fc weight host-side (no in-kernel concat needed).
    w_flat = fc_w.reshape(-1).astype(jnp.float32)
    wt = w_flat[:Ft].reshape(1, Ft)
    wi = w_flat[Ft:].reshape(1, Fi)
    b = fc_b.reshape(1, 1).astype(jnp.float32)

    # Tile the grid over TB-row batch blocks (pad N up to a multiple of TB).
    TB = min(block_n, _round_up(N, 8))
    Np = _round_up(N, TB)
    if Np != N:
        text = jnp.pad(text, ((0, Np - N), (0, 0)))
        inp = jnp.pad(inp, ((0, Np - N), (0, 0), (0, 0)))

    out = pl.pallas_call(
        _cross_attention_kernel,
        out_shape=jax.ShapeDtypeStruct((Np, Fi), jnp.float32),
        grid_spec=pltpu.PrefetchScalarGridSpec(
            num_scalar_prefetch=0,
            grid=(Np // TB,),
            in_specs=[
                pl.BlockSpec((TB, Ft), lambda i: (i, 0)),       # text
                pl.BlockSpec((TB, T, Fi), lambda i: (i, 0, 0)),  # input
                pl.BlockSpec((1, Ft), lambda i: (0, 0)),         # w_text
                pl.BlockSpec((1, Fi), lambda i: (0, 0)),         # w_input
                pl.BlockSpec((1, 1), lambda i: (0, 0)),          # bias (scalar)
            ],
            out_specs=pl.BlockSpec((TB, Fi), lambda i: (i, 0)),  # lane-dense 2-D output
        ),
        compiler_params=pltpu.CompilerParams(
            dimension_semantics=("parallel",)),
    )(text, inp, wt, wi, b)
    return out[:N]


if __name__ == "__main__":
    # Small, lane-friendly shapes consistent with the module.
    N, T = 4, 8            # batch, timesteps
    Ft = 64                # text_features
    Fi = 128               # input_features (lane-aligned; real models use >=128 dims)

    key = jax.random.PRNGKey(0)
    k_text, k_inp, k_w, k_b = jax.random.split(key, 4)

    text = jax.random.normal(k_text, (N, Ft), dtype=jnp.float32)
    inp = jax.random.normal(k_inp, (N, T, Fi), dtype=jnp.float32)

    # nn.Linear(Ft+Fi, 1) init (PyTorch uniform bound 1/sqrt(fan_in)).
    D = Ft + Fi
    bound = 1.0 / math.sqrt(D)
    fc_w = jax.random.uniform(k_w, (1, D), jnp.float32, -bound, bound)
    fc_b = jax.random.uniform(k_b, (1,), jnp.float32, -bound, bound)

    out = cross_attention(text, inp, fc_w, fc_b)
    jax.block_until_ready(out)

    # Reference in plain JAX (mirrors the PyTorch forward exactly).
    text_expand = jnp.broadcast_to(text[:, None, :], (N, T, Ft))
    cat = jnp.concatenate([text_expand, inp], axis=2)            # (N, T, Ft+Fi)
    gate_ref = jax.nn.sigmoid(cat @ fc_w.reshape(-1) + fc_b[0])  # (N, T)
    ref = jnp.sum(gate_ref[:, :, None] * inp, axis=1)            # (N, Fi)

    assert out.shape == (N, Fi)
    assert jnp.allclose(out, ref, atol=1e-4, rtol=1e-4)
    print("KERNEL_OK")
</pallas_src>

<mosaic_0001>
module attributes {stable_mosaic.version = 11 : i64} {
  func.func @_cross_attention_kernel(%arg0: i32, %arg1: memref<8x64xf32, #tpu.memory_space<vmem>>, %arg2: memref<8x8x128xf32, #tpu.memory_space<vmem>>, %arg3: memref<1x64xf32, #tpu.memory_space<vmem>>, %arg4: memref<1x128xf32, #tpu.memory_space<vmem>>, %arg5: memref<1x1xf32, #tpu.memory_space<vmem>>, %arg6: memref<8x128xf32, #tpu.memory_space<vmem>>) attributes {dimension_semantics = [#tpu.dimension_semantics<parallel>], iteration_bounds = array<i64: 1>, scalar_prefetch = 0 : i64, scratch_operands = 0 : i64, tpu.core_type = #tpu.core_type<tc>, window_params = [{transform_indices = @transform_0, window_bounds = array<i64: 8, 64>}, {transform_indices = @transform_1, window_bounds = array<i64: 8, 8, 128>}, {pipeline_mode = #tpu.pipeline_mode<synchronous>, transform_indices = @transform_2, window_bounds = array<i64: 1, 64>}, {pipeline_mode = #tpu.pipeline_mode<synchronous>, transform_indices = @transform_3, window_bounds = array<i64: 1, 128>}, {pipeline_mode = #tpu.pipeline_mode<synchronous>, transform_indices = @transform_4, window_bounds = array<i64: 1, 1>}, {transform_indices = @transform_5, window_bounds = array<i64: 8, 128>}]} {
    %c0 = arith.constant 0 : index
    %c0_0 = arith.constant 0 : index
    %0 = vector.load %arg1[%c0, %c0_0] : memref<8x64xf32, #tpu.memory_space<vmem>>, vector<8x64xf32>
    %c0_1 = arith.constant 0 : index
    %c0_2 = arith.constant 0 : index
    %c0_3 = arith.constant 0 : index
    %1 = vector.load %arg2[%c0_1, %c0_2, %c0_3] : memref<8x8x128xf32, #tpu.memory_space<vmem>>, vector<8x8x128xf32>
    %c0_4 = arith.constant 0 : index
    %c0_5 = arith.constant 0 : index
    %2 = vector.load %arg3[%c0_4, %c0_5] : memref<1x64xf32, #tpu.memory_space<vmem>>, vector<1x64xf32>
    %c0_6 = arith.constant 0 : index
    %c0_7 = arith.constant 0 : index
    %3 = vector.load %arg4[%c0_6, %c0_7] : memref<1x128xf32, #tpu.memory_space<vmem>>, vector<1x128xf32>
    %4 = vector.shape_cast %3 : vector<1x128xf32> to vector<1x1x128xf32>
    %c0_8 = arith.constant 0 : index
    %c0_9 = arith.constant 0 : index
    %5 = vector.load %arg5[%c0_8, %c0_9] : memref<1x1xf32, #tpu.memory_space<vmem>>, vector<1x1xf32>
    %6 = vector.extract %5[0, 0] : f32 from vector<1x1xf32>
    %7 = vector.broadcast %2 : vector<1x64xf32> to vector<8x64xf32>
    %8 = arith.mulf %0, %7 : vector<8x64xf32>
    %cst = arith.constant dense<0.000000e+00> : vector<8xf32>
    %9 = vector.multi_reduction <add>, %8, %cst [1] : vector<8x64xf32> to vector<8xf32>
    %10 = vector.shape_cast %9 : vector<8xf32> to vector<8x1xf32>
    %11 = vector.broadcast %4 : vector<1x1x128xf32> to vector<8x8x128xf32>
    %12 = arith.mulf %1, %11 : vector<8x8x128xf32>
    %cst_10 = arith.constant dense<0.000000e+00> : vector<8x8xf32>
    %13 = vector.multi_reduction <add>, %12, %cst_10 [2] : vector<8x8x128xf32> to vector<8x8xf32>
    %14 = vector.broadcast %10 : vector<8x1xf32> to vector<8x8xf32>
    %15 = arith.addf %14, %13 : vector<8x8xf32>
    %16 = vector.broadcast %6 : f32 to vector<8x8xf32>
    %17 = arith.addf %15, %16 : vector<8x8xf32>
    %cst_11 = arith.constant 0.000000e+00 : f32
    %18 = vector.broadcast %cst_11 : f32 to vector<8x8xf32>
    %19 = arith.subf %18, %17 : vector<8x8xf32>
    %20 = math.exp %19 : vector<8x8xf32>
    %cst_12 = arith.constant 1.000000e+00 : f32
    %21 = vector.broadcast %cst_12 : f32 to vector<8x8xf32>
    %22 = arith.addf %21, %20 : vector<8x8xf32>
    %cst_13 = arith.constant 1.000000e+00 : f32
    %23 = vector.broadcast %cst_13 : f32 to vector<8x8xf32>
    %24 = arith.divf %23, %22 : vector<8x8xf32>
    %25 = vector.shape_cast %24 : vector<8x8xf32> to vector<8x1x8xf32>
    "tpu.trace_start"() <{level = 10 : i32, message = "nqt,ntf->nqf"}> : () -> ()
    %cst_14 = arith.constant dense<0.000000e+00> : vector<8x1x128xf32>
    %26 = tpu.matmul %25, %1, %cst_14 {dimension_numbers = #tpu.dot_dimension_numbers<[2], [1], [1], [2], [0, 0, 0, 1, 1, 2], [0], [0]>} : vector<8x1x8xf32>, vector<8x8x128xf32>, vector<8x1x128xf32> -> vector<8x1x128xf32>
    "tpu.trace_stop"() : () -> ()
    %27 = vector.shape_cast %26 : vector<8x1x128xf32> to vector<8x128xf32>
    %c0_15 = arith.constant 0 : index
    %c0_16 = arith.constant 0 : index
    %28 = vector.load %arg6[%c0_15, %c0_16] : memref<8x128xf32, #tpu.memory_space<vmem>>, vector<8x128xf32>
    tpu.vector_store %arg6[%c0_15, %c0_16], %27 {strides = array<i32>} : memref<8x128xf32, #tpu.memory_space<vmem>>, vector<8x128xf32>,
    return
  }
  func.func @transform_0(%arg0: i32) -> (i32, i32) {
    %c0_i32 = arith.constant 0 : i32
    %c0_i32_0 = arith.constant 0 : i32
    return %arg0, %c0_i32 : i32, i32
  }
  func.func @transform_1(%arg0: i32) -> (i32, i32, i32) {
    %c0_i32 = arith.constant 0 : i32
    %c0_i32_0 = arith.constant 0 : i32
    %c0_i32_1 = arith.constant 0 : i32
    return %arg0, %c0_i32, %c0_i32_0 : i32, i32, i32
  }
  func.func @transform_2(%arg0: i32) -> (i32, i32) {
    %c0_i32 = arith.constant 0 : i32
    %c0_i32_0 = arith.constant 0 : i32
    %c0_i32_1 = arith.constant 0 : i32
    return %c0_i32, %c0_i32_0 : i32, i32
  }
  func.func @transform_3(%arg0: i32) -> (i32, i32) {
    %c0_i32 = arith.constant 0 : i32
    %c0_i32_0 = arith.constant 0 : i32
    %c0_i32_1 = arith.constant 0 : i32
    return %c0_i32, %c0_i32_0 : i32, i32
  }
  func.func @transform_4(%arg0: i32) -> (i32, i32) {
    %c0_i32 = arith.constant 0 : i32
    %c0_i32_0 = arith.constant 0 : i32
    %c0_i32_1 = arith.constant 0 : i32
    return %c0_i32, %c0_i32_0 : i32, i32
  }
  func.func @transform_5(%arg0: i32) -> (i32, i32) {
    %c0_i32 = arith.constant 0 : i32
    %c0_i32_0 = arith.constant 0 : i32
    return %arg0, %c0_i32 : i32, i32
  }
}

</mosaic_0001>

<llo_original>
// kernel: tpu_custom_call.1
$region0: #{tpu_custom_call.1}
  #allocation0 [shape = 'u32[]', space=smem, size = 0x4, offset = 0x4, fixed_abs, tag = 'smem constant byte address 0x4 - core index']
  #allocation1 [shape = 'u32[144,128]{1,0:T(1,128)}', space=vmem, size = 0x12000, scoped, tag = 'internal scratch']
  #allocation2 [shape = 'f32[1,1]{1,0:T(1,128)S(1)}', space=vmem, size = 0x200, scoped, tag = 'scoped memory for tpu_custom_call.1']
  %s0 = inlined_call_operand.hbm [shape: f32[8,64], index: 0, kind: input, shape index: {}]
  %s1 = inlined_call_operand.hbm [shape: f32[8,8,128], index: 1, kind: input, shape index: {}]
  %s2 = inlined_call_operand.vmem [shape: f32[1,64], index: 2, kind: input, shape index: {}]
  %s3 = inlined_call_operand.vmem [shape: f32[1,128], index: 3, kind: input, shape index: {}]
  %s4 = inlined_call_operand.<no memory space> [shape: f32[1,1], index: 4, kind: input, shape index: {}]
  %s5 = inlined_call_operand.hbm [shape: f32[8,128], index: 5, kind: output, shape index: {}]
  %s6 = sld [smem:[#allocation0]]
  $region38: #{tpu_custom_call.1} parent=0
    _
  %s8 = ssub.s32 1, %s6
  %s9 = scalar_select 0, %s8, %s6
  %v10 = vstv %s4
  %11 = vst [vmem:[#allocation2] sm:$0x1] %v10
  $region1: #{tpu_custom_call.1} parent=0
    #allocation3 [shape = 'u8[4096]{0}', space=vmem, size = 0x1000, scoped, tag = 'input window, operand 0, single buffered']
    #allocation4 [shape = 's32[1]{0}', space=sflag, size = 0x4, scoped, tag = 'scoped memory for tpu_custom_call.1']
    #allocation5 [shape = 's32[1]{0}', space=sflag, size = 0x4, scoped, tag = 'scoped memory for tpu_custom_call.1']
    #allocation6 [shape = 'u8[32768]{0}', space=vmem, size = 0x8000, scoped, tag = 'input window, operand 1, single buffered']
    #allocation7 [shape = 's32[1]{0}', space=sflag, size = 0x4, scoped, tag = 'scoped memory for tpu_custom_call.1']
    #allocation8 [shape = 'u8[4096]{0}', space=vmem, size = 0x1000, scoped, tag = 'output window, operand 0, single buffered']
    %12 = vsyncpa [#allocation4], 0
    %13 = vsyncpa [#allocation7], 0
    %14 = vsyncpa [#allocation5], 0
    // Predicated region
    $region2: #{tpu_custom_call.1} parent=1 // pred_check
      _
    $region3: #{tpu_custom_call.1} parent=1 // pred_check_branch
      %16 = sbr.rel (0) target = $region5
    $region4: #{tpu_custom_call.1} parent=1 // pred_region
      %s18 = ssub.s32 128, 128
      %19 = vsyncadd [#allocation4], %s18
      %s21 = sshll.u32 [#allocation3], 4
      %s22 = int_to_ptr.vmem [resolvable:$true] %s21
      %24 = dma.hbm_to_vmem [thread:$0]  %s0, 128, %s22, [#allocation4]
    $region5: #{tpu_custom_call.1} parent=1 // pred_fallthru
      _
    // Predicated region
    $region6: #{tpu_custom_call.1} parent=1 // pred_check
      _
    $region7: #{tpu_custom_call.1} parent=1 // pred_check_branch
      %26 = sbr.rel (0) target = $region9
    $region8: #{tpu_custom_call.1} parent=1 // pred_region
      %s28 = ssub.s32 1024, 1024
      %29 = vsyncadd [#allocation7], %s28
      %s30 = sshll.u32 [#allocation6], 4
      %s31 = int_to_ptr.vmem [resolvable:$true] %s30
      %36 = dma.hbm_to_vmem [thread:$0]  %s1, 1024, %s31, [#allocation7], 128, 128, 8
    $region9: #{tpu_custom_call.1} parent=1 // pred_fallthru
      _
    // Predicated region
    $region10: #{tpu_custom_call.1} parent=1 // pred_check
      _
    $region11: #{tpu_custom_call.1} parent=1 // pred_check_branch
      %38 = sbr.rel (0) target = $region13
    $region12: #{tpu_custom_call.1} parent=1 // pred_region
      _
    $region13: #{tpu_custom_call.1} parent=1 // pred_fallthru
      _
    // Predicated region
    $region14: #{tpu_custom_call.1} parent=1 // pred_check
      _
    $region15: #{tpu_custom_call.1} parent=1 // pred_check_branch
      %40 = sbr.rel (0) target = $region17
    $region16: #{tpu_custom_call.1} parent=1 // pred_region
      _
    $region17: #{tpu_custom_call.1} parent=1 // pred_fallthru
      _
    // Predicated region
    $region18: #{tpu_custom_call.1} parent=1 // pred_check
      _
    $region19: #{tpu_custom_call.1} parent=1 // pred_check_branch
      %42 = sbr.rel (0) target = $region21
    $region20: #{tpu_custom_call.1} parent=1 // pred_region
      _
    $region21: #{tpu_custom_call.1} parent=1 // pred_fallthru
      _
    // Predicated region
    $region22: #{tpu_custom_call.1} parent=1 // pred_check
      _
    $region23: #{tpu_custom_call.1} parent=1 // pred_check_branch
      %44 = sbr.rel (0) target = $region25
    $region24: #{tpu_custom_call.1} parent=1 // pred_region
      %45 = dma.done [#allocation4], 128
    $region25: #{tpu_custom_call.1} parent=1 // pred_fallthru
      _
    // Predicated region
    $region26: #{tpu_custom_call.1} parent=1 // pred_check
      _
    $region27: #{tpu_custom_call.1} parent=1 // pred_check_branch
      %47 = sbr.rel (0) target = $region29
    $region28: #{tpu_custom_call.1} parent=1 // pred_region
      %48 = dma.done [#allocation7], 1024
    $region29: #{tpu_custom_call.1} parent=1 // pred_fallthru
      _
    %v49 = vld [vmem:[#allocation3] sm:$0xff]
    %v50 = vld [vmem:[#allocation6] sm:$0xff]
    %v51 = vld [vmem:[#allocation6 + $0x8] sm:$0xff]
    %v52 = vld [vmem:[#allocation6 + $0x10] sm:$0xff]
    %v53 = vld [vmem:[#allocation6 + $0x18] sm:$0xff]
    %v54 = vld [vmem:[#allocation6 + $0x20] sm:$0xff]
    %v55 = vld [vmem:[#allocation6 + $0x28] sm:$0xff]
    %v56 = vld [vmem:[#allocation6 + $0x30] sm:$0xff]
    %v57 = vld [vmem:[#allocation6 + $0x38] sm:$0xff]
    %v58 = vld [vmem:[%s2] sm:$0x1]
    %v59 = vld [vmem:[%s3] sm:$0x1]
    %v60 = vld [vmem:[#allocation2] sm:$0x1]
    %s61 = vtos %v60
    %v63 = vlaneseq
    %v64 = vshrl.u32 %v63, 7
    %v65 = vsub.s32 0, %v64
    %v66 = vrot.slane %v58, %v65
    %v68 = vmul.f32 %v49, %v66
    %vm69 = vcmask 523264
    %v70 = vsel %vm69, %v68, 0.0
    %71 = vadd.xlane.f32.xlu0 %v70
    %v72 = vpop.xlane.xlu0 %71
    %v74 = vlaneseq
    %v75 = vshrl.u32 %v74, 7
    %v76 = vsub.s32 0, %v75
    %v77 = vrot.slane %v59, %v76
    %v79 = vmul.f32 %v50, %v77
    %v80 = vmul.f32 %v51, %v77
    %v81 = vmul.f32 %v52, %v77
    %v82 = vmul.f32 %v53, %v77
    %v83 = vmul.f32 %v54, %v77
    %v84 = vmul.f32 %v55, %v77
    %v85 = vmul.f32 %v56, %v77
    %v86 = vmul.f32 %v57, %v77
    %87 = vadd.xlane.f32.xlu0 %v79
    %v88 = vpop.xlane.xlu0 %87
    %89 = vadd.xlane.f32.xlu0 %v80
    %v90 = vpop.xlane.xlu0 %89
    %91 = vadd.xlane.f32.xlu0 %v81
    %v92 = vpop.xlane.xlu0 %91
    %93 = vadd.xlane.f32.xlu0 %v82
    %v94 = vpop.xlane.xlu0 %93
    %95 = vadd.xlane.f32.xlu0 %v83
    %v96 = vpop.xlane.xlu0 %95
    %97 = vadd.xlane.f32.xlu0 %v84
    %v98 = vpop.xlane.xlu0 %97
    %99 = vadd.xlane.f32.xlu0 %v85
    %v100 = vpop.xlane.xlu0 %99
    %101 = vadd.xlane.f32.xlu0 %v86
    %v102 = vpop.xlane.xlu0 %101
    %v111 = vlaneseq
    %v112 = vand.u32 %v111, 127
    %v113 = vlaneseq
    %v114 = vshrl.u32 %v113, 7
    %v115 = vsub.s32 %v112, %v114
    %v116 = vrot.slane %v88, %v115
    %v117 = vlaneseq
    %v118 = vshrl.u32 %v117, 7
    %v119 = vsub.s32 %v112, %v118
    %v120 = vrot.slane %v90, %v119
    %v121 = vlaneseq
    %v122 = vshrl.u32 %v121, 7
    %v123 = vsub.s32 %v112, %v122
    %v124 = vrot.slane %v92, %v123
    %v125 = vlaneseq
    %v126 = vshrl.u32 %v125, 7
    %v127 = vsub.s32 %v112, %v126
    %v128 = vrot.slane %v94, %v127
    %v129 = vlaneseq
    %v130 = vshrl.u32 %v129, 7
    %v131 = vsub.s32 %v112, %v130
    %v132 = vrot.slane %v96, %v131
    %v133 = vlaneseq
    %v134 = vshrl.u32 %v133, 7
    %v135 = vsub.s32 %v112, %v134
    %v136 = vrot.slane %v98, %v135
    %v137 = vlaneseq
    %v138 = vshrl.u32 %v137, 7
    %v139 = vsub.s32 %v112, %v138
    %v140 = vrot.slane %v100, %v139
    %v141 = vlaneseq
    %v142 = vshrl.u32 %v141, 7
    %v143 = vsub.s32 %v112, %v142
    %v144 = vrot.slane %v102, %v143
    %vm145 = vcmask 1041409
    %v146 = vsel %vm145, %v120, %v116
    %vm147 = vcmask 1042434
    %v148 = vsel %vm147, %v124, %v146
    %vm149 = vcmask 1043459
    %v150 = vsel %vm149, %v128, %v148
    %vm151 = vcmask 1044484
    %v152 = vsel %vm151, %v132, %v150
    %vm153 = vcmask 1045509
    %v154 = vsel %vm153, %v136, %v152
    %vm155 = vcmask 1046534
    %v156 = vsel %vm155, %v140, %v154
    %vm157 = vcmask 1047559
    %v158 = vsel %vm157, %v144, %v156
    %v160 = vadd.f32 %v72, %v158
    %v161 = vstv %s61
    %v162 = vadd.f32 %v160, %v161
    %v163 = vsub.f32 0.0, %v162
    %v164 = vmul.f32 %v163, 1.442695
    %v165 = vpow.pop %v164
    %v166 = vadd.f32 %v165, 1.0
    %v167 = vrcp.pop %v166
    %v168 = vmul.f32 1.0, %v167
    %v170 = vcombine.high %v168, %v168
    %v172 = vunpack.c.l.s4 1966171168
    %v173 = vunpack.c.0.s8 %v172
    %v174 = vlaneseq
    %v175 = vshrl.u32 %v174, 7
    %v176 = vsub.s32 %v173, %v175
    %v177 = vrot.slane %v168, %v176
    %v179 = vunpack.c.l.s4 1966171168
    %v180 = vunpack.c.0.s8 %v179
    %v181 = vlaneseq
    %v182 = vshrl.u32 %v181, 7
    %v183 = vsub.s32 %v180, %v182
    %v184 = vrot.slane %v170, %v183
    %v185 = vcombine.high %v177, %v177
    %v186 = vcombine.high %v184, %v184
    %v188 = vunpack.c.l.s4 1966171168
    %v189 = vunpack.c.0.s8 %v188
    %v190 = vlaneseq
    %v191 = vshrl.u32 %v190, 7
    %v192 = vsub.s32 %v189, %v191
    %v193 = vrot.slane %v177, %v192
    %v195 = vunpack.c.l.s4 1966171168
    %v196 = vunpack.c.0.s8 %v195
    %v197 = vlaneseq
    %v198 = vshrl.u32 %v197, 7
    %v199 = vsub.s32 %v196, %v198
    %v200 = vrot.slane %v184, %v199
    %v202 = vunpack.c.l.s4 1966171168
    %v203 = vunpack.c.0.s8 %v202
    %v204 = vlaneseq
    %v205 = vshrl.u32 %v204, 7
    %v206 = vsub.s32 %v203, %v205
    %v207 = vrot.slane %v185, %v206
    %v209 = vunpack.c.l.s4 1966171168
    %v210 = vunpack.c.0.s8 %v209
    %v211 = vlaneseq
    %v212 = vshrl.u32 %v211, 7
    %v213 = vsub.s32 %v210, %v212
    %v214 = vrot.slane %v186, %v213
    %v215 = vcombine.high %v193, %v193
    %v216 = vcombine.high %v200, %v200
    %v217 = vcombine.high %v207, %v207
    %v218 = vcombine.high %v214, %v214
    %vm219 = vcmask 64512
    %v220 = vsel %vm219, %v193, 0
    %222 = vmatprep.subr.mxu0 0.0
    %223 = vmatpush1.msra.mxu0 0.0
    %224 = vmatprep.subr.mxu0 0.0
    %225 = vmatpush1.msra.mxu0 0.0
    %226 = vmatprep.subr.mxu0 0.0
    %227 = vmatpush1.msra.mxu0 0.0
    %228 = vmatprep.subr.mxu0 0.0
    %229 = vmatpush1.msra.mxu0 0.0
    %230 = vmatprep.subr.mxu0 0.0
    %231 = vmatpush1.msra.mxu0 0.0
    %232 = vmatprep.subr.mxu0 0.0
    %233 = vmatpush1.msra.mxu0 0.0
    %234 = vmatprep.subr.mxu0 0.0
    %235 = vmatpush1.msra.mxu0 0.0
    %236 = vmatprep.subr.mxu0 0.0
    %237 = vmatpush1.msra.mxu0 0.0
    %238 = vmatprep.subr.mxu0 0.0
    %239 = vmatpush1.msra.mxu0 0.0
    %240 = vmatprep.subr.mxu0 0.0
    %241 = vmatpush1.msra.mxu0 0.0
    %242 = vmatprep.subr.mxu0 0.0
    %243 = vmatpush1.msra.mxu0 0.0
    %244 = vmatprep.subr.mxu0 0.0
    %245 = vmatpush1.msra.mxu0 0.0
    %246 = vmatprep.subr.mxu0 0.0
    %247 = vmatpush1.msra.mxu0 0.0
    %248 = vmatprep.subr.mxu0 0.0
    %249 = vmatpush1.msra.mxu0 0.0
    %250 = vmatprep.subr.mxu0 0.0
    %251 = vmatpush1.msra.mxu0 0.0
    %252 = vmatprep.subr.mxu0 0.0
    %253 = vmatpush1.msra.mxu0 %v50
    %254 = vmatprep.subr.mxu0 0.0
    %255 = vmatpush2.msra.mxu0 0.0
    %256 = vmatprep.subr.mxu0 0.0
    %257 = vmatpush2.msra.mxu0 0.0
    %258 = vmatprep.subr.mxu0 0.0
    %259 = vmatpush2.msra.mxu0 0.0
    %260 = vmatprep.subr.mxu0 0.0
    %261 = vmatpush2.msra.mxu0 0.0
    %262 = vmatprep.subr.mxu0 0.0
    %263 = vmatpush2.msra.mxu0 0.0
    %264 = vmatprep.subr.mxu0 0.0
    %265 = vmatpush2.msra.mxu0 0.0
    %266 = vmatprep.subr.mxu0 0.0
    %267 = vmatpush2.msra.mxu0 0.0
    %268 = vmatprep.subr.mxu0 0.0
    %269 = vmatpush2.msra.mxu0 0.0
    %270 = vmatprep.subr.mxu0 0.0
    %271 = vmatpush2.msra.mxu0 0.0
    %272 = vmatprep.subr.mxu0 0.0
    %273 = vmatpush2.msra.mxu0 0.0
    %274 = vmatprep.subr.mxu0 0.0
    %275 = vmatpush2.msra.mxu0 0.0
    %276 = vmatprep.subr.mxu0 0.0
    %277 = vmatpush2.msra.mxu0 0.0
    %278 = vmatprep.subr.mxu0 0.0
    %279 = vmatpush2.msra.mxu0 0.0
    %280 = vmatprep.subr.mxu0 0.0
    %281 = vmatpush2.msra.mxu0 0.0
    %282 = vmatprep.subr.mxu0 0.0
    %283 = vmatpush2.msra.mxu0 0.0
    %284 = vmatprep.subr.mxu0 0.0
    %285 = vmatpush2.msra.mxu0 0.0
    %286 = vmatprep.mubr.f32.mxu0 0.0
    %287 = vmatmul.mubr.f32.gmra.mxu0 %v220
    %v288 = vpop.f32.mrf.mxu0
    %v289 = vadd.f32 0.0, %v288
    %v290 = vpop.f32.mrf.mxu0
    %291 = vdwg.mxu0
    %v292 = vsel %vm219, %v207, 0
    %294 = vmatprep.subr.mxu0 0.0
    %295 = vmatpush1.msra.mxu0 0.0
    %296 = vmatprep.subr.mxu0 0.0
    %297 = vmatpush1.msra.mxu0 0.0
    %298 = vmatprep.subr.mxu0 0.0
    %299 = vmatpush1.msra.mxu0 0.0
    %300 = vmatprep.subr.mxu0 0.0
    %301 = vmatpush1.msra.mxu0 0.0
    %302 = vmatprep.subr.mxu0 0.0
    %303 = vmatpush1.msra.mxu0 0.0
    %304 = vmatprep.subr.mxu0 0.0
    %305 = vmatpush1.msra.mxu0 0.0
    %306 = vmatprep.subr.mxu0 0.0
    %307 = vmatpush1.msra.mxu0 0.0
    %308 = vmatprep.subr.mxu0 0.0
    %309 = vmatpush1.msra.mxu0 0.0
    %310 = vmatprep.subr.mxu0 0.0
    %311 = vmatpush1.msra.mxu0 0.0
    %312 = vmatprep.subr.mxu0 0.0
    %313 = vmatpush1.msra.mxu0 0.0
    %314 = vmatprep.subr.mxu0 0.0
    %315 = vmatpush1.msra.mxu0 0.0
    %316 = vmatprep.subr.mxu0 0.0
    %317 = vmatpush1.msra.mxu0 0.0
    %318 = vmatprep.subr.mxu0 0.0
    %319 = vmatpush1.msra.mxu0 0.0
    %320 = vmatprep.subr.mxu0 0.0
    %321 = vmatpush1.msra.mxu0 0.0
    %322 = vmatprep.subr.mxu0 0.0
    %323 = vmatpush1.msra.mxu0 0.0
    %324 = vmatprep.subr.mxu0 0.0
    %325 = vmatpush1.msra.mxu0 %v51
    %326 = vmatprep.subr.mxu0 0.0
    %327 = vmatpush2.msra.mxu0 0.0
    %328 = vmatprep.subr.mxu0 0.0
    %329 = vmatpush2.msra.mxu0 0.0
    %330 = vmatprep.subr.mxu0 0.0
    %331 = vmatpush2.msra.mxu0 0.0
    %332 = vmatprep.subr.mxu0 0.0
    %333 = vmatpush2.msra.mxu0 0.0
    %334 = vmatprep.subr.mxu0 0.0
    %335 = vmatpush2.msra.mxu0 0.0
    %336 = vmatprep.subr.mxu0 0.0
    %337 = vmatpush2.msra.mxu0 0.0
    %338 = vmatprep.subr.mxu0 0.0
    %339 = vmatpush2.msra.mxu0 0.0
    %340 = vmatprep.subr.mxu0 0.0
    %341 = vmatpush2.msra.mxu0 0.0
    %342 = vmatprep.subr.mxu0 0.0
    %343 = vmatpush2.msra.mxu0 0.0
    %344 = vmatprep.subr.mxu0 0.0
    %345 = vmatpush2.msra.mxu0 0.0
    %346 = vmatprep.subr.mxu0 0.0
    %347 = vmatpush2.msra.mxu0 0.0
    %348 = vmatprep.subr.mxu0 0.0
    %349 = vmatpush2.msra.mxu0 0.0
    %350 = vmatprep.subr.mxu0 0.0
    %351 = vmatpush2.msra.mxu0 0.0
    %352 = vmatprep.subr.mxu0 0.0
    %353 = vmatpush2.msra.mxu0 0.0
    %354 = vmatprep.subr.mxu0 0.0
    %355 = vmatpush2.msra.mxu0 0.0
    %356 = vmatprep.subr.mxu0 0.0
    %357 = vmatpush2.msra.mxu0 0.0
    %358 = vmatprep.mubr.f32.mxu0 0.0
    %359 = vmatmul.mubr.f32.gmra.mxu0 %v292
    %v360 = vpop.f32.mrf.mxu0
    %v361 = vadd.f32 0.0, %v360
    %v362 = vpop.f32.mrf.mxu0
    %363 = vdwg.mxu0
    %v364 = vsel %vm219, %v215, 0
    %366 = vmatprep.subr.mxu0 0.0
    %367 = vmatpush1.msra.mxu0 0.0
    %368 = vmatprep.subr.mxu0 0.0
    %369 = vmatpush1.msra.mxu0 0.0
    %370 = vmatprep.subr.mxu0 0.0
    %371 = vmatpush1.msra.mxu0 0.0
    %372 = vmatprep.subr.mxu0 0.0
    %373 = vmatpush1.msra.mxu0 0.0
    %374 = vmatprep.subr.mxu0 0.0
    %375 = vmatpush1.msra.mxu0 0.0
    %376 = vmatprep.subr.mxu0 0.0
    %377 = vmatpush1.msra.mxu0 0.0
    %378 = vmatprep.subr.mxu0 0.0
    %379 = vmatpush1.msra.mxu0 0.0
    %380 = vmatprep.subr.mxu0 0.0
    %381 = vmatpush1.msra.mxu0 0.0
    %382 = vmatprep.subr.mxu0 0.0
    %383 = vmatpush1.msra.mxu0 0.0
    %384 = vmatprep.subr.mxu0 0.0
    %385 = vmatpush1.msra.mxu0 0.0
    %386 = vmatprep.subr.mxu0 0.0
    %387 = vmatpush1.msra.mxu0 0.0
    %388 = vmatprep.subr.mxu0 0.0
    %389 = vmatpush1.msra.mxu0 0.0
    %390 = vmatprep.subr.mxu0 0.0
    %391 = vmatpush1.msra.mxu0 0.0
    %392 = vmatprep.subr.mxu0 0.0
    %393 = vmatpush1.msra.mxu0 0.0
    %394 = vmatprep.subr.mxu0 0.0
    %395 = vmatpush1.msra.mxu0 0.0
    %396 = vmatprep.subr.mxu0 0.0
    %397 = vmatpush1.msra.mxu0 %v52
    %398 = vmatprep.subr.mxu0 0.0
    %399 = vmatpush2.msra.mxu0 0.0
    %400 = vmatprep.subr.mxu0 0.0
    %401 = vmatpush2.msra.mxu0 0.0
    %402 = vmatprep.subr.mxu0 0.0
    %403 = vmatpush2.msra.mxu0 0.0
    %404 = vmatprep.subr.mxu0 0.0
    %405 = vmatpush2.msra.mxu0 0.0
    %406 = vmatprep.subr.mxu0 0.0
    %407 = vmatpush2.msra.mxu0 0.0
    %408 = vmatprep.subr.mxu0 0.0
    %409 = vmatpush2.msra.mxu0 0.0
    %410 = vmatprep.subr.mxu0 0.0
    %411 = vmatpush2.msra.mxu0 0.0
    %412 = vmatprep.subr.mxu0 0.0
    %413 = vmatpush2.msra.mxu0 0.0
    %414 = vmatprep.subr.mxu0 0.0
    %415 = vmatpush2.msra.mxu0 0.0
    %416 = vmatprep.subr.mxu0 0.0
    %417 = vmatpush2.msra.mxu0 0.0
    %418 = vmatprep.subr.mxu0 0.0
    %419 = vmatpush2.msra.mxu0 0.0
    %420 = vmatprep.subr.mxu0 0.0
    %421 = vmatpush2.msra.mxu0 0.0
    %422 = vmatprep.subr.mxu0 0.0
    %423 = vmatpush2.msra.mxu0 0.0
    %424 = vmatprep.subr.mxu0 0.0
    %425 = vmatpush2.msra.mxu0 0.0
    %426 = vmatprep.subr.mxu0 0.0
    %427 = vmatpush2.msra.mxu0 0.0
    %428 = vmatprep.subr.mxu0 0.0
    %429 = vmatpush2.msra.mxu0 0.0
    %430 = vmatprep.mubr.f32.mxu0 0.0
    %431 = vmatmul.mubr.f32.gmra.mxu0 %v364
    %v432 = vpop.f32.mrf.mxu0
    %v433 = vadd.f32 0.0, %v432
    %v434 = vpop.f32.mrf.mxu0
    %435 = vdwg.mxu0
    %v436 = vsel %vm219, %v217, 0
    %438 = vmatprep.subr.mxu0 0.0
    %439 = vmatpush1.msra.mxu0 0.0
    %440 = vmatprep.subr.mxu0 0.0
    %441 = vmatpush1.msra.mxu0 0.0
    %442 = vmatprep.subr.mxu0 0.0
    %443 = vmatpush1.msra.mxu0 0.0
    %444 = vmatprep.subr.mxu0 0.0
    %445 = vmatpush1.msra.mxu0 0.0
    %446 = vmatprep.subr.mxu0 0.0
    %447 = vmatpush1.msra.mxu0 0.0
    %448 = vmatprep.subr.mxu0 0.0
    %449 = vmatpush1.msra.mxu0 0.0
    %450 = vmatprep.subr.mxu0 0.0
    %451 = vmatpush1.msra.mxu0 0.0
    %452 = vmatprep.subr.mxu0 0.0
    %453 = vmatpush1.msra.mxu0 0.0
    %454 = vmatprep.subr.mxu0 0.0
    %455 = vmatpush1.msra.mxu0 0.0
    %456 = vmatprep.subr.mxu0 0.0
    %457 = vmatpush1.msra.mxu0 0.0
    %458 = vmatprep.subr.mxu0 0.0
    %459 = vmatpush1.msra.mxu0 0.0
    %460 = vmatprep.subr.mxu0 0.0
    %461 = vmatpush1.msra.mxu0 0.0
    %462 = vmatprep.subr.mxu0 0.0
    %463 = vmatpush1.msra.mxu0 0.0
    %464 = vmatprep.subr.mxu0 0.0
    %465 = vmatpush1.msra.mxu0 0.0
    %466 = vmatprep.subr.mxu0 0.0
    %467 = vmatpush1.msra.mxu0 0.0
    %468 = vmatprep.subr.mxu0 0.0
    %469 = vmatpush1.msra.mxu0 %v53
    %470 = vmatprep.subr.mxu0 0.0
    %471 = vmatpush2.msra.mxu0 0.0
    %472 = vmatprep.subr.mxu0 0.0
    %473 = vmatpush2.msra.mxu0 0.0
    %474 = vmatprep.subr.mxu0 0.0
    %475 = vmatpush2.msra.mxu0 0.0
    %476 = vmatprep.subr.mxu0 0.0
    %477 = vmatpush2.msra.mxu0 0.0
    %478 = vmatprep.subr.mxu0 0.0
    %479 = vmatpush2.msra.mxu0 0.0
    %480 = vmatprep.subr.mxu0 0.0
    %481 = vmatpush2.msra.mxu0 0.0
    %482 = vmatprep.subr.mxu0 0.0
    %483 = vmatpush2.msra.mxu0 0.0
    %484 = vmatprep.subr.mxu0 0.0
    %485 = vmatpush2.msra.mxu0 0.0
    %486 = vmatprep.subr.mxu0 0.0
    %487 = vmatpush2.msra.mxu0 0.0
    %488 = vmatprep.subr.mxu0 0.0
    %489 = vmatpush2.msra.mxu0 0.0
    %490 = vmatprep.subr.mxu0 0.0
    %491 = vmatpush2.msra.mxu0 0.0
    %492 = vmatprep.subr.mxu0 0.0
    %493 = vmatpush2.msra.mxu0 0.0
    %494 = vmatprep.subr.mxu0 0.0
    %495 = vmatpush2.msra.mxu0 0.0
    %496 = vmatprep.subr.mxu0 0.0
    %497 = vmatpush2.msra.mxu0 0.0
    %498 = vmatprep.subr.mxu0 0.0
    %499 = vmatpush2.msra.mxu0 0.0
    %500 = vmatprep.subr.mxu0 0.0
    %501 = vmatpush2.msra.mxu0 0.0
    %502 = vmatprep.mubr.f32.mxu0 0.0
    %503 = vmatmul.mubr.f32.gmra.mxu0 %v436
    %v504 = vpop.f32.mrf.mxu0
    %v505 = vadd.f32 0.0, %v504
    %v506 = vpop.f32.mrf.mxu0
    %507 = vdwg.mxu0
    %v508 = vsel %vm219, %v200, 0
    %510 = vmatprep.subr.mxu0 0.0
    %511 = vmatpush1.msra.mxu0 0.0
    %512 = vmatprep.subr.mxu0 0.0
    %513 = vmatpush1.msra.mxu0 0.0
    %514 = vmatprep.subr.mxu0 0.0
    %515 = vmatpush1.msra.mxu0 0.0
    %516 = vmatprep.subr.mxu0 0.0
    %517 = vmatpush1.msra.mxu0 0.0
    %518 = vmatprep.subr.mxu0 0.0
    %519 = vmatpush1.msra.mxu0 0.0
    %520 = vmatprep.subr.mxu0 0.0
    %521 = vmatpush1.msra.mxu0 0.0
    %522 = vmatprep.subr.mxu0 0.0
    %523 = vmatpush1.msra.mxu0 0.0
    %524 = vmatprep.subr.mxu0 0.0
    %525 = vmatpush1.msra.mxu0 0.0
    %526 = vmatprep.subr.mxu0 0.0
    %527 = vmatpush1.msra.mxu0 0.0
    %528 = vmatprep.subr.mxu0 0.0
    %529 = vmatpush1.msra.mxu0 0.0
    %530 = vmatprep.subr.mxu0 0.0
    %531 = vmatpush1.msra.mxu0 0.0
    %532 = vmatprep.subr.mxu0 0.0
    %533 = vmatpush1.msra.mxu0 0.0
    %534 = vmatprep.subr.mxu0 0.0
    %535 = vmatpush1.msra.mxu0 0.0
    %536 = vmatprep.subr.mxu0 0.0
    %537 = vmatpush1.msra.mxu0 0.0
    %538 = vmatprep.subr.mxu0 0.0
    %539 = vmatpush1.msra.mxu0 0.0
    %540 = vmatprep.subr.mxu0 0.0
    %541 = vmatpush1.msra.mxu0 %v54
    %542 = vmatprep.subr.mxu0 0.0
    %543 = vmatpush2.msra.mxu0 0.0
    %544 = vmatprep.subr.mxu0 0.0
    %545 = vmatpush2.msra.mxu0 0.0
    %546 = vmatprep.subr.mxu0 0.0
    %547 = vmatpush2.msra.mxu0 0.0
    %548 = vmatprep.subr.mxu0 0.0
    %549 = vmatpush2.msra.mxu0 0.0
    %550 = vmatprep.subr.mxu0 0.0
    %551 = vmatpush2.msra.mxu0 0.0
    %552 = vmatprep.subr.mxu0 0.0
    %553 = vmatpush2.msra.mxu0 0.0
    %554 = vmatprep.subr.mxu0 0.0
    %555 = vmatpush2.msra.mxu0 0.0
    %556 = vmatprep.subr.mxu0 0.0
    %557 = vmatpush2.msra.mxu0 0.0
    %558 = vmatprep.subr.mxu0 0.0
    %559 = vmatpush2.msra.mxu0 0.0
    %560 = vmatprep.subr.mxu0 0.0
    %561 = vmatpush2.msra.mxu0 0.0
    %562 = vmatprep.subr.mxu0 0.0
    %563 = vmatpush2.msra.mxu0 0.0
    %564 = vmatprep.subr.mxu0 0.0
    %565 = vmatpush2.msra.mxu0 0.0
    %566 = vmatprep.subr.mxu0 0.0
    %567 = vmatpush2.msra.mxu0 0.0
    %568 = vmatprep.subr.mxu0 0.0
    %569 = vmatpush2.msra.mxu0 0.0
    %570 = vmatprep.subr.mxu0 0.0
    %571 = vmatpush2.msra.mxu0 0.0
    %572 = vmatprep.subr.mxu0 0.0
    %573 = vmatpush2.msra.mxu0 0.0
    %574 = vmatprep.mubr.f32.mxu0 0.0
    %575 = vmatmul.mubr.f32.gmra.mxu0 %v508
    %v576 = vpop.f32.mrf.mxu0
    %v577 = vadd.f32 0.0, %v576
    %v578 = vpop.f32.mrf.mxu0
    %579 = vdwg.mxu0
    %v580 = vsel %vm219, %v214, 0
    %582 = vmatprep.subr.mxu0 0.0
    %583 = vmatpush1.msra.mxu0 0.0
    %584 = vmatprep.subr.mxu0 0.0
    %585 = vmatpush1.msra.mxu0 0.0
    %586 = vmatprep.subr.mxu0 0.0
    %587 = vmatpush1.msra.mxu0 0.0
    %588 = vmatprep.subr.mxu0 0.0
    %589 = vmatpush1.msra.mxu0 0.0
    %590 = vmatprep.subr.mxu0 0.0
    %591 = vmatpush1.msra.mxu0 0.0
    %592 = vmatprep.subr.mxu0 0.0
    %593 = vmatpush1.msra.mxu0 0.0
    %594 = vmatprep.subr.mxu0 0.0
    %595 = vmatpush1.msra.mxu0 0.0
    %596 = vmatprep.subr.mxu0 0.0
    %597 = vmatpush1.msra.mxu0 0.0
    %598 = vmatprep.subr.mxu0 0.0
    %599 = vmatpush1.msra.mxu0 0.0
    %600 = vmatprep.subr.mxu0 0.0
    %601 = vmatpush1.msra.mxu0 0.0
    %602 = vmatprep.subr.mxu0 0.0
    %603 = vmatpush1.msra.mxu0 0.0
    %604 = vmatprep.subr.mxu0 0.0
    %605 = vmatpush1.msra.mxu0 0.0
    %606 = vmatprep.subr.mxu0 0.0
    %607 = vmatpush1.msra.mxu0 0.0
    %608 = vmatprep.subr.mxu0 0.0
    %609 = vmatpush1.msra.mxu0 0.0
    %610 = vmatprep.subr.mxu0 0.0
    %611 = vmatpush1.msra.mxu0 0.0
    %612 = vmatprep.subr.mxu0 0.0
    %613 = vmatpush1.msra.mxu0 %v55
    %614 = vmatprep.subr.mxu0 0.0
    %615 = vmatpush2.msra.mxu0 0.0
    %616 = vmatprep.subr.mxu0 0.0
    %617 = vmatpush2.msra.mxu0 0.0
    %618 = vmatprep.subr.mxu0 0.0
    %619 = vmatpush2.msra.mxu0 0.0
    %620 = vmatprep.subr.mxu0 0.0
    %621 = vmatpush2.msra.mxu0 0.0
    %622 = vmatprep.subr.mxu0 0.0
    %623 = vmatpush2.msra.mxu0 0.0
    %624 = vmatprep.subr.mxu0 0.0
    %625 = vmatpush2.msra.mxu0 0.0
    %626 = vmatprep.subr.mxu0 0.0
    %627 = vmatpush2.msra.mxu0 0.0
    %628 = vmatprep.subr.mxu0 0.0
    %629 = vmatpush2.msra.mxu0 0.0
    %630 = vmatprep.subr.mxu0 0.0
    %631 = vmatpush2.msra.mxu0 0.0
    %632 = vmatprep.subr.mxu0 0.0
    %633 = vmatpush2.msra.mxu0 0.0
    %634 = vmatprep.subr.mxu0 0.0
    %635 = vmatpush2.msra.mxu0 0.0
    %636 = vmatprep.subr.mxu0 0.0
    %637 = vmatpush2.msra.mxu0 0.0
    %638 = vmatprep.subr.mxu0 0.0
    %639 = vmatpush2.msra.mxu0 0.0
    %640 = vmatprep.subr.mxu0 0.0
    %641 = vmatpush2.msra.mxu0 0.0
    %642 = vmatprep.subr.mxu0 0.0
    %643 = vmatpush2.msra.mxu0 0.0
    %644 = vmatprep.subr.mxu0 0.0
    %645 = vmatpush2.msra.mxu0 0.0
    %646 = vmatprep.mubr.f32.mxu0 0.0
    %647 = vmatmul.mubr.f32.gmra.mxu0 %v580
    %v648 = vpop.f32.mrf.mxu0
    %v649 = vadd.f32 0.0, %v648
    %v650 = vpop.f32.mrf.mxu0
    %651 = vdwg.mxu0
    %v652 = vsel %vm219, %v216, 0
    %654 = vmatprep.subr.mxu0 0.0
    %655 = vmatpush1.msra.mxu0 0.0
    %656 = vmatprep.subr.mxu0 0.0
    %657 = vmatpush1.msra.mxu0 0.0
    %658 = vmatprep.subr.mxu0 0.0
    %659 = vmatpush1.msra.mxu0 0.0
    %660 = vmatprep.subr.mxu0 0.0
    %661 = vmatpush1.msra.mxu0 0.0
    %662 = vmatprep.subr.mxu0 0.0
    %663 = vmatpush1.msra.mxu0 0.0
    %664 = vmatprep.subr.mxu0 0.0
    %665 = vmatpush1.msra.mxu0 0.0
    %666 = vmatprep.subr.mxu0 0.0
    %667 = vmatpush1.msra.mxu0 0.0
    %668 = vmatprep.subr.mxu0 0.0
    %669 = vmatpush1.msra.mxu0 0.0
    %670 = vmatprep.subr.mxu0 0.0
    %671 = vmatpush1.msra.mxu0 0.0
    %672 = vmatprep.subr.mxu0 0.0
    %673 = vmatpush1.msra.mxu0 0.0
    %674 = vmatprep.subr.mxu0 0.0
    %675 = vmatpush1.msra.mxu0 0.0
    %676 = vmatprep.subr.mxu0 0.0
    %677 = vmatpush1.msra.mxu0 0.0
    %678 = vmatprep.subr.mxu0 0.0
    %679 = vmatpush1.msra.mxu0 0.0
    %680 = vmatprep.subr.mxu0 0.0
    %681 = vmatpush1.msra.mxu0 0.0
    %682 = vmatprep.subr.mxu0 0.0
    %683 = vmatpush1.msra.mxu0 0.0
    %684 = vmatprep.subr.mxu0 0.0
    %685 = vmatpush1.msra.mxu0 %v56
    %686 = vmatprep.subr.mxu0 0.0
    %687 = vmatpush2.msra.mxu0 0.0
    %688 = vmatprep.subr.mxu0 0.0
    %689 = vmatpush2.msra.mxu0 0.0
    %690 = vmatprep.subr.mxu0 0.0
    %691 = vmatpush2.msra.mxu0 0.0
    %692 = vmatprep.subr.mxu0 0.0
    %693 = vmatpush2.msra.mxu0 0.0
    %694 = vmatprep.subr.mxu0 0.0
    %695 = vmatpush2.msra.mxu0 0.0
    %696 = vmatprep.subr.mxu0 0.0
    %697 = vmatpush2.msra.mxu0 0.0
    %698 = vmatprep.subr.mxu0 0.0
    %699 = vmatpush2.msra.mxu0 0.0
    %700 = vmatprep.subr.mxu0 0.0
    %701 = vmatpush2.msra.mxu0 0.0
    %702 = vmatprep.subr.mxu0 0.0
    %703 = vmatpush2.msra.mxu0 0.0
    %704 = vmatprep.subr.mxu0 0.0
    %705 = vmatpush2.msra.mxu0 0.0
    %706 = vmatprep.subr.mxu0 0.0
    %707 = vmatpush2.msra.mxu0 0.0
    %708 = vmatprep.subr.mxu0 0.0
    %709 = vmatpush2.msra.mxu0 0.0
    %710 = vmatprep.subr.mxu0 0.0
    %711 = vmatpush2.msra.mxu0 0.0
    %712 = vmatprep.subr.mxu0 0.0
    %713 = vmatpush2.msra.mxu0 0.0
    %714 = vmatprep.subr.mxu0 0.0
    %715 = vmatpush2.msra.mxu0 0.0
    %716 = vmatprep.subr.mxu0 0.0
    %717 = vmatpush2.msra.mxu0 0.0
    %718 = vmatprep.mubr.f32.mxu0 0.0
    %719 = vmatmul.mubr.f32.gmra.mxu0 %v652
    %v720 = vpop.f32.mrf.mxu0
    %v721 = vadd.f32 0.0, %v720
    %v722 = vpop.f32.mrf.mxu0
    %723 = vdwg.mxu0
    %v724 = vsel %vm219, %v218, 0
    %726 = vmatprep.subr.mxu0 0.0
    %727 = vmatpush1.msra.mxu0 0.0
    %728 = vmatprep.subr.mxu0 0.0
    %729 = vmatpush1.msra.mxu0 0.0
    %730 = vmatprep.subr.mxu0 0.0
    %731 = vmatpush1.msra.mxu0 0.0
    %732 = vmatprep.subr.mxu0 0.0
    %733 = vmatpush1.msra.mxu0 0.0
    %734 = vmatprep.subr.mxu0 0.0
    %735 = vmatpush1.msra.mxu0 0.0
    %736 = vmatprep.subr.mxu0 0.0
    %737 = vmatpush1.msra.mxu0 0.0
    %738 = vmatprep.subr.mxu0 0.0
    %739 = vmatpush1.msra.mxu0 0.0
    %740 = vmatprep.subr.mxu0 0.0
    %741 = vmatpush1.msra.mxu0 0.0
    %742 = vmatprep.subr.mxu0 0.0
    %743 = vmatpush1.msra.mxu0 0.0
    %744 = vmatprep.subr.mxu0 0.0
    %745 = vmatpush1.msra.mxu0 0.0
    %746 = vmatprep.subr.mxu0 0.0
    %747 = vmatpush1.msra.mxu0 0.0
    %748 = vmatprep.subr.mxu0 0.0
    %749 = vmatpush1.msra.mxu0 0.0
    %750 = vmatprep.subr.mxu0 0.0
    %751 = vmatpush1.msra.mxu0 0.0
    %752 = vmatprep.subr.mxu0 0.0
    %753 = vmatpush1.msra.mxu0 0.0
    %754 = vmatprep.subr.mxu0 0.0
    %755 = vmatpush1.msra.mxu0 0.0
    %756 = vmatprep.subr.mxu0 0.0
    %757 = vmatpush1.msra.mxu0 %v57
    %758 = vmatprep.subr.mxu0 0.0
    %759 = vmatpush2.msra.mxu0 0.0
    %760 = vmatprep.subr.mxu0 0.0
    %761 = vmatpush2.msra.mxu0 0.0
    %762 = vmatprep.subr.mxu0 0.0
    %763 = vmatpush2.msra.mxu0 0.0
    %764 = vmatprep.subr.mxu0 0.0
    %765 = vmatpush2.msra.mxu0 0.0
    %766 = vmatprep.subr.mxu0 0.0
    %767 = vmatpush2.msra.mxu0 0.0
    %768 = vmatprep.subr.mxu0 0.0
    %769 = vmatpush2.msra.mxu0 0.0
    %770 = vmatprep.subr.mxu0 0.0
    %771 = vmatpush2.msra.mxu0 0.0
    %772 = vmatprep.subr.mxu0 0.0
    %773 = vmatpush2.msra.mxu0 0.0
    %774 = vmatprep.subr.mxu0 0.0
    %775 = vmatpush2.msra.mxu0 0.0
    %776 = vmatprep.subr.mxu0 0.0
    %777 = vmatpush2.msra.mxu0 0.0
    %778 = vmatprep.subr.mxu0 0.0
    %779 = vmatpush2.msra.mxu0 0.0
    %780 = vmatprep.subr.mxu0 0.0
    %781 = vmatpush2.msra.mxu0 0.0
    %782 = vmatprep.subr.mxu0 0.0
    %783 = vmatpush2.msra.mxu0 0.0
    %784 = vmatprep.subr.mxu0 0.0
    %785 = vmatpush2.msra.mxu0 0.0
    %786 = vmatprep.subr.mxu0 0.0
    %787 = vmatpush2.msra.mxu0 0.0
    %788 = vmatprep.subr.mxu0 0.0
    %789 = vmatpush2.msra.mxu0 0.0
    %790 = vmatprep.mubr.f32.mxu0 0.0
    %791 = vmatmul.mubr.f32.gmra.mxu0 %v724
    %v792 = vpop.f32.mrf.mxu0
    %v793 = vadd.f32 0.0, %v792
    %v794 = vpop.f32.mrf.mxu0
    %795 = vdwg.mxu0
    %v804 = vrot.slane %v361, 7
    %v805 = vsel %vm145, %v804, %v289
    %v806 = vrot.slane %v433, 6
    %v807 = vsel %vm147, %v806, %v805
    %v808 = vrot.slane %v505, 5
    %v809 = vsel %vm149, %v808, %v807
    %v810 = vrot.slane %v577, 4
    %v811 = vsel %vm151, %v810, %v809
    %v812 = vrot.slane %v649, 3
    %v813 = vsel %vm153, %v812, %v811
    %v814 = vrot.slane %v721, 2
    %v815 = vsel %vm155, %v814, %v813
    %v816 = vrot.slane %v793, 1
    %v817 = vsel %vm157, %v816, %v815
    %819 = vst [vmem:[#allocation8] sm:$0xff] %v817
    // Predicated region
    $region30: #{tpu_custom_call.1} parent=1 // pred_check
      _
    $region31: #{tpu_custom_call.1} parent=1 // pred_check_branch
      %821 = sbr.rel (0) target = $region33
    $region32: #{tpu_custom_call.1} parent=1 // pred_region
      %s823 = ssub.s32 128, 128
      %824 = vsyncadd [#allocation5], %s823
      %s826 = sshll.u32 [#allocation8], 4
      %s827 = int_to_ptr.vmem [resolvable:$true] %s826
      %829 = dma.vmem_to_hbm [thread:$0]  %s827, 128, %s5, [#allocation5]
    $region33: #{tpu_custom_call.1} parent=1 // pred_fallthru
      _
    // Predicated region
    $region34: #{tpu_custom_call.1} parent=1 // pred_check
      _
    $region35: #{tpu_custom_call.1} parent=1 // pred_check_branch
      %831 = sbr.rel (0) target = $region37
    $region36: #{tpu_custom_call.1} parent=1 // pred_region
      %832 = dma.done [#allocation5], 128
    $region37: #{tpu_custom_call.1} parent=1 // pred_fallthru
      _
    %833 = vsyncpa [#allocation4], 1
    %834 = vsyncpa [#allocation7], 1
    %835 = vsyncpa [#allocation5], 1

</llo_original>
